<compile_context>
chip_gen: v7x
topology: tpu7x:2x2x1
jax: 0.10.0
libtpu: 0.0.40
codegen_flags: <defaults>
</compile_context>

<pallas_src>
import functools

import jax
import jax.numpy as jnp
from jax.experimental import pallas as pl
from jax.experimental.pallas import tpu as pltpu


def _round_up(x, m):
    return ((x + m - 1) // m) * m


def _transform_kernel(x_ref, w_ref, ss_ref, o_ref, *maybe_acc, activation, nk):
    """One (tm, tn) output tile of  act( (x @ W^T) * scale + shift ).

    Grid axis 2 (size nk) is the K reduction.  nk == 1: single MXU pass, fully
    fused epilogue, no accumulator traffic.  nk > 1: accumulate into the f32
    output block itself (when the output dtype is f32) or into a dedicated
    f32 VMEM scratch, writing directly at k==0 (no zeros fill) and folding the
    final partial product + epilogue into the last step.
    """
    acc_ref = maybe_acc[0] if maybe_acc else o_ref

    prod = jnp.dot(x_ref[...], w_ref[...], preferred_element_type=jnp.float32)

    def _epilogue(acc_f32):
        ss = ss_ref[...]                          # (2, tn) f32: row0=scale, row1=shift
        y = acc_f32 * ss[0:1, :] + ss[1:2, :]
        if activation == "tanh":
            y = jnp.tanh(y)
        elif activation == "relu":
            y = jnp.maximum(y, 0.0)
        o_ref[...] = y.astype(o_ref.dtype)

    if nk == 1:
        _epilogue(prod)
        return

    k = pl.program_id(2)

    @pl.when(k == 0)
    def _():
        acc_ref[...] = prod.astype(acc_ref.dtype)

    @pl.when(jnp.logical_and(k > 0, k < nk - 1))
    def _():
        acc_ref[...] += prod.astype(acc_ref.dtype)

    @pl.when(k == nk - 1)
    def _():
        _epilogue(acc_ref[...].astype(jnp.float32) + prod)


def transform_net_forward(x, w_t, scale, shift, *, activation=None,
                          compute_dtype=jnp.bfloat16,
                          tm_target=256,
                          vmem_budget_bytes=40 * 1024 * 1024):
    """Fused  act( (x @ w_t) * scale + shift )  on TPU via Pallas."""
    M, K = x.shape
    K2, N = w_t.shape
    assert K == K2, (K, K2)
    assert scale.shape[-1] == N and shift.shape[-1] == N

    out_dtype = x.dtype
    cbytes = jnp.dtype(compute_dtype).itemsize
    obytes = jnp.dtype(out_dtype).itemsize
    out_is_f32 = jnp.dtype(out_dtype) == jnp.dtype(jnp.float32)

    # Sublane alignment for the M (batch) tile: packed dtypes pack 2/4 rows.
    m_align = {4: 8, 2: 16, 1: 32}.get(cbytes, 8)

    # M tile: cover M with minimal padding, at most ~tm_target rows per tile.
    n_m_tiles = pl.cdiv(M, tm_target)
    tm = _round_up(pl.cdiv(M, n_m_tiles), m_align)
    M_pad = _round_up(M, tm)

    N128 = _round_up(N, 128)
    K128 = _round_up(K, 128)

    def vmem_bytes(tn, tk):
        b = 2 * tm * tk * cbytes          # x   (double-buffered)
        b += 2 * tk * tn * cbytes         # W^T (double-buffered)
        b += 2 * tm * tn * obytes         # out (double-buffered)
        b += 2 * 2 * tn * 4               # scale/shift slab
        b += tm * tn * 4                  # f32 accumulator (worst case)
        return b

    # Preferred layout for this layer's real dims: W^T fully VMEM-resident
    # (tn=N, tk=K) so the K grid axis collapses and W^T is DMA'd exactly once.
    if vmem_bytes(N128, K128) <= vmem_budget_bytes:
        tn, tk = N128, K128
        # v7x megacore: if the M axis has a single tile, split N so the second
        # TensorCore gets work (only when the halves stay 128-lane aligned).
        if M_pad // tm == 1 and N128 >= 256 and (N128 // 128) % 2 == 0:
            tn = N128 // 2
    else:
        tn = min(N128, 256)
        tk = min(K128, 2048)
        while tk > 128 and vmem_bytes(tn, tk) > vmem_budget_bytes:
            tk -= 128
        while tn > 128 and vmem_bytes(tn, tk) > vmem_budget_bytes:
            tn -= 128

    N_pad = _round_up(N, tn)
    K_pad = _round_up(K, tk)
    grid = (M_pad // tm, N_pad // tn, K_pad // tk)
    nk = grid[2]

    # Cast operands to the MXU-native compute dtype and zero-pad to tile
    # multiples (zero rows/cols contribute nothing; padding sliced off below).
    xc = x.astype(compute_dtype)
    wc = w_t.astype(compute_dtype)
    if (M_pad, K_pad) != (M, K):
        xc = jnp.pad(xc, ((0, M_pad - M), (0, K_pad - K)))
    if (K_pad, N_pad) != (K, N):
        wc = jnp.pad(wc, ((0, K_pad - K), (0, N_pad - N)))
    ss = jnp.stack([scale, shift]).astype(jnp.float32)       # (2, N)
    if N_pad != N:
        ss = jnp.pad(ss, ((0, 0), (0, N_pad - N)))

    # Dedicated accumulator only when K is a grid axis and the output block
    # (resident across k) cannot itself hold f32 partials.
    use_scratch = (nk > 1) and not out_is_f32
    scratch = [pltpu.VMEM((tm, tn), jnp.float32)] if use_scratch else []

    kernel = functools.partial(_transform_kernel, activation=activation, nk=nk)

    # Tight VMEM limit: enough for the chosen tiles + headroom, capped at
    # 48 MiB so it is safe on v7x's 64 MiB/TC as well as v5e/v6e's 128 MiB.
    vmem_limit = min(48 * 1024 * 1024,
                     max(32 * 1024 * 1024,
                         vmem_bytes(tn, tk) + 4 * 1024 * 1024))

    out = pl.pallas_call(
        kernel,
        out_shape=jax.ShapeDtypeStruct((M_pad, N_pad), out_dtype),
        grid_spec=pltpu.PrefetchScalarGridSpec(
            num_scalar_prefetch=0,
            grid=grid,
            in_specs=[
                pl.BlockSpec((tm, tk), lambda i, j, k: (i, k)),   # x tile (bf16)
                pl.BlockSpec((tk, tn), lambda i, j, k: (k, j)),   # W^T tile (bf16)
                pl.BlockSpec((2, tn), lambda i, j, k: (0, j)),    # scale/shift slab
            ],
            out_specs=pl.BlockSpec((tm, tn), lambda i, j, k: (i, j)),
            scratch_shapes=scratch,
        ),
        compiler_params=pltpu.CompilerParams(
            dimension_semantics=("parallel", "parallel", "arbitrary"),
            vmem_limit_bytes=vmem_limit,
        ),
    )(xc, wc, ss)

    if (M_pad, N_pad) != (M, N):
        out = out[:M, :N]
    return out


class TransformNetPallas:
    """Mirror of the PyTorch TransformNet (inference forward)."""

    BN_EPS = 1e-5

    def __init__(self, opt, key):
        d_in, d_out = opt.fc_layers[0], opt.fc_layers[1]
        self.d_in, self.d_out = d_in, d_out
        # Xavier-uniform fc1 weight (PyTorch layout [out, in]), zero bias.
        bound = (6.0 / (d_in + d_out)) ** 0.5
        w = jax.random.uniform(key, (d_out, d_in), jnp.float32, -bound, bound)
        self.w_t = jnp.transpose(w)                        # [in, out] f32 master
        self.w_t_bf16 = self.w_t.astype(jnp.bfloat16)      # MXU operand copy
        self.b = jnp.zeros((d_out,), jnp.float32)

        self.batch_norm = bool(opt.batch_norm)
        if self.batch_norm:
            self.gamma = jnp.ones((d_out,), jnp.float32)
            self.beta = jnp.zeros((d_out,), jnp.float32)
            self.running_mean = jnp.zeros((d_out,), jnp.float32)
            self.running_var = jnp.ones((d_out,), jnp.float32)

        self.activation = opt.activation if opt.activation in ("tanh", "relu") else None
        self.dropout = float(opt.dropout)    # identity at inference
        # TODO(synk): training-mode dropout (pltpu.prng_*) and batch-statistic BN
        # are not implemented; inference semantics only.

    def _fold_scale_shift(self):
        if self.batch_norm:
            s = self.gamma * jax.lax.rsqrt(self.running_var + self.BN_EPS)
            shift = (self.b - self.running_mean) * s + self.beta
            return s, shift
        return jnp.ones((self.d_out,), jnp.float32), self.b

    def __call__(self, input_x):
        scale, shift = self._fold_scale_shift()
        return transform_net_forward(input_x, self.w_t_bf16, scale, shift,
                                     activation=self.activation)

    def get_output_size(self):
        return self.d_out


if __name__ == "__main__":
    root = jax.random.PRNGKey(0)

    def reference(net, x):
        # Same math the kernel performs: bf16 operands, f32 accumulate/epilogue.
        xr = x.astype(jnp.bfloat16).astype(jnp.float32)
        wr = net.w_t.astype(jnp.bfloat16).astype(jnp.float32)
        y = jnp.matmul(xr, wr, precision=jax.lax.Precision.HIGHEST) + net.b
        if net.batch_norm:
            y = (y - net.running_mean) * jax.lax.rsqrt(
                net.running_var + net.BN_EPS) * net.gamma + net.beta
        if net.activation == "tanh":
            y = jnp.tanh(y)
        elif net.activation == "relu":
            y = jnp.maximum(y, 0.0)
        return y

    class OptA:  # BN + tanh, MXU-friendly dims (resident-W single-step path)
        fc_layers = (1024, 128); batch_norm = True; activation = "tanh"; dropout = 0.5

    class OptB:  # no BN, relu, non-128-multiple dims + odd batch (padding path)
        fc_layers = (300, 200); batch_norm = False; activation = "relu"; dropout = 0.0

    all_ok = True
    for i, (opt, batch) in enumerate([(OptA, 8), (OptB, 5)]):
        k_w, k_x = jax.random.split(jax.random.fold_in(root, i))
        net = TransformNetPallas(opt, k_w)
        x = jax.random.normal(k_x, (batch, opt.fc_layers[0]), dtype=jnp.float32)
        y = jax.block_until_ready(net(x))
        ref = reference(net, x)
        assert y.shape == (batch, opt.fc_layers[1]) and y.dtype == x.dtype
        all_ok &= bool(jnp.allclose(y, ref, atol=2e-3, rtol=2e-3))

    assert all_ok
    print("KERNEL_OK")
</pallas_src>

<mosaic_0001>
module attributes {stable_mosaic.version = 11 : i64} {
  func.func @_transform_kernel(%arg0: i32, %arg1: i32, %arg2: i32, %arg3: memref<16x1024xbf16, #tpu.memory_space<vmem>>, %arg4: memref<1024x128xbf16, #tpu.memory_space<vmem>>, %arg5: memref<2x128xf32, #tpu.memory_space<vmem>>, %arg6: memref<16x128xf32, #tpu.memory_space<vmem>>) attributes {dimension_semantics = [#tpu.dimension_semantics<parallel>, #tpu.dimension_semantics<parallel>, #tpu.dimension_semantics<arbitrary>], iteration_bounds = array<i64: 1, 1, 1>, scalar_prefetch = 0 : i64, scratch_operands = 0 : i64, tpu.core_type = #tpu.core_type<tc>, window_params = [{transform_indices = @transform_0, window_bounds = array<i64: 16, 1024>}, {transform_indices = @transform_1, window_bounds = array<i64: 1024, 128>}, {transform_indices = @transform_2, window_bounds = array<i64: 2, 128>}, {transform_indices = @transform_3, window_bounds = array<i64: 16, 128>}]} {
    %c0 = arith.constant 0 : index
    %c0_0 = arith.constant 0 : index
    %0 = vector.load %arg3[%c0, %c0_0] : memref<16x1024xbf16, #tpu.memory_space<vmem>>, vector<16x1024xbf16>
    %c0_1 = arith.constant 0 : index
    %c0_2 = arith.constant 0 : index
    %1 = vector.load %arg4[%c0_1, %c0_2] : memref<1024x128xbf16, #tpu.memory_space<vmem>>, vector<1024x128xbf16>
    %cst = arith.constant dense<0.000000e+00> : vector<16x128xf32>
    %2 = tpu.matmul %0, %1, %cst {dimension_numbers = #tpu.dot_dimension_numbers<[1], [0], [0], [1], [0, 0, 1, 1], [], []>} : vector<16x1024xbf16>, vector<1024x128xbf16>, vector<16x128xf32> -> vector<16x128xf32>
    %c0_3 = arith.constant 0 : index
    %c0_4 = arith.constant 0 : index
    %3 = vector.load %arg5[%c0_3, %c0_4] : memref<2x128xf32, #tpu.memory_space<vmem>>, vector<2x128xf32>
    %4 = vector.extract_strided_slice %3 {offsets = [0, 0], sizes = [1, 128], strides = [1, 1]} : vector<2x128xf32> to vector<1x128xf32>
    %5 = vector.broadcast %4 : vector<1x128xf32> to vector<16x128xf32>
    %6 = arith.mulf %2, %5 : vector<16x128xf32>
    %7 = vector.extract_strided_slice %3 {offsets = [1, 0], sizes = [1, 128], strides = [1, 1]} : vector<2x128xf32> to vector<1x128xf32>
    %8 = vector.broadcast %7 : vector<1x128xf32> to vector<16x128xf32>
    %9 = arith.addf %6, %8 : vector<16x128xf32>
    %10 = math.tanh %9 : vector<16x128xf32>
    %c0_5 = arith.constant 0 : index
    %c0_6 = arith.constant 0 : index
    %11 = vector.load %arg6[%c0_5, %c0_6] : memref<16x128xf32, #tpu.memory_space<vmem>>, vector<16x128xf32>
    tpu.vector_store %arg6[%c0_5, %c0_6], %10 {strides = array<i32>} : memref<16x128xf32, #tpu.memory_space<vmem>>, vector<16x128xf32>,
    return
  }
  func.func @transform_0(%arg0: i32, %arg1: i32, %arg2: i32) -> (i32, i32) {
    %c0_i32 = arith.constant 0 : i32
    return %arg0, %arg2 : i32, i32
  }
  func.func @transform_1(%arg0: i32, %arg1: i32, %arg2: i32) -> (i32, i32) {
    %c0_i32 = arith.constant 0 : i32
    return %arg2, %arg1 : i32, i32
  }
  func.func @transform_2(%arg0: i32, %arg1: i32, %arg2: i32) -> (i32, i32) {
    %c0_i32 = arith.constant 0 : i32
    %c0_i32_0 = arith.constant 0 : i32
    return %c0_i32, %arg1 : i32, i32
  }
  func.func @transform_3(%arg0: i32, %arg1: i32, %arg2: i32) -> (i32, i32) {
    %c0_i32 = arith.constant 0 : i32
    return %arg0, %arg1 : i32, i32
  }
}

</mosaic_0001>

<llo_original>
// kernel: tpu_custom_call.1
$region0: #{tpu_custom_call.1}
  #allocation0 [shape = 'u32[]', space=smem, size = 0x4, offset = 0x4, fixed_abs, tag = 'smem constant byte address 0x4 - core index']
  #allocation1 [shape = 'u32[144,128]{1,0:T(1,128)}', space=vmem, size = 0x12000, scoped, tag = 'internal scratch']
  %s0 = inlined_call_operand.hbm [shape: bf16[16,1024], index: 0, kind: input, shape index: {}]
  %s1 = inlined_call_operand.hbm [shape: bf16[1024,128], index: 1, kind: input, shape index: {}]
  %s2 = inlined_call_operand.vmem [shape: f32[2,128], index: 2, kind: input, shape index: {}]
  %s3 = inlined_call_operand.hbm [shape: f32[16,128], index: 3, kind: output, shape index: {}]
  %s4 = sld [smem:[#allocation0]]
  $region30: #{tpu_custom_call.1} parent=0
    _
  %s6 = ssub.s32 1, %s4
  %s7 = scalar_select 0, %s6, %s4
  $region1: #{tpu_custom_call.1} parent=0
    #allocation2 [shape = 'u8[32768]{0}', space=vmem, size = 0x8000, scoped, tag = 'input window, operand 0, single buffered']
    #allocation3 [shape = 's32[1]{0}', space=sflag, size = 0x4, scoped, tag = 'scoped memory for tpu_custom_call.1']
    #allocation4 [shape = 's32[1]{0}', space=sflag, size = 0x4, scoped, tag = 'scoped memory for tpu_custom_call.1']
    #allocation5 [shape = 'u8[262144]{0}', space=vmem, size = 0x40000, scoped, tag = 'input window, operand 1, single buffered']
    #allocation6 [shape = 's32[1]{0}', space=sflag, size = 0x4, scoped, tag = 'scoped memory for tpu_custom_call.1']
    #allocation7 [shape = 'u8[8192]{0}', space=vmem, size = 0x2000, scoped, tag = 'output window, operand 0, single buffered']
    %8 = vsyncpa [#allocation3], 0
    %9 = vsyncpa [#allocation6], 0
    %10 = vsyncpa [#allocation4], 0
    // Predicated region
    $region2: #{tpu_custom_call.1} parent=1 // pred_check
      _
    $region3: #{tpu_custom_call.1} parent=1 // pred_check_branch
      %12 = sbr.rel (0) target = $region5
    $region4: #{tpu_custom_call.1} parent=1 // pred_region
      %s14 = ssub.s32 1024, 1024
      %15 = vsyncadd [#allocation3], %s14
      %s16 = sshll.u32 [#allocation2], 4
      %s17 = int_to_ptr.vmem [resolvable:$true] %s16
      %22 = dma.hbm_to_vmem [thread:$0]  %s0, 1024, %s17, [#allocation3], 512, 512, 32
    $region5: #{tpu_custom_call.1} parent=1 // pred_fallthru
      _
    // Predicated region
    $region6: #{tpu_custom_call.1} parent=1 // pred_check
      _
    $region7: #{tpu_custom_call.1} parent=1 // pred_check_branch
      %24 = sbr.rel (0) target = $region9
    $region8: #{tpu_custom_call.1} parent=1 // pred_region
      %s26 = ssub.s32 8192, 8192
      %27 = vsyncadd [#allocation6], %s26
      %s28 = sshll.u32 [#allocation5], 4
      %s29 = int_to_ptr.vmem [resolvable:$true] %s28
      %34 = dma.hbm_to_vmem [thread:$0]  %s1, 8192, %s29, [#allocation6], 64, 64, 4
    $region9: #{tpu_custom_call.1} parent=1 // pred_fallthru
      _
    // Predicated region
    $region10: #{tpu_custom_call.1} parent=1 // pred_check
      _
    $region11: #{tpu_custom_call.1} parent=1 // pred_check_branch
      %36 = sbr.rel (0) target = $region13
    $region12: #{tpu_custom_call.1} parent=1 // pred_region
      _
    $region13: #{tpu_custom_call.1} parent=1 // pred_fallthru
      _
    // Predicated region
    $region14: #{tpu_custom_call.1} parent=1 // pred_check
      _
    $region15: #{tpu_custom_call.1} parent=1 // pred_check_branch
      %38 = sbr.rel (0) target = $region17
    $region16: #{tpu_custom_call.1} parent=1 // pred_region
      %39 = dma.done [#allocation3], 1024
    $region17: #{tpu_custom_call.1} parent=1 // pred_fallthru
      _
    // Predicated region
    $region18: #{tpu_custom_call.1} parent=1 // pred_check
      _
    $region19: #{tpu_custom_call.1} parent=1 // pred_check_branch
      %41 = sbr.rel (0) target = $region21
    $region20: #{tpu_custom_call.1} parent=1 // pred_region
      %42 = dma.done [#allocation6], 8192
    $region21: #{tpu_custom_call.1} parent=1 // pred_fallthru
      _
    %v44 = vld [vmem:[#allocation2] sm:$0xff]
    %v45 = vld [vmem:[#allocation2 + $0x8] sm:$0xff]
    %v46 = vld [vmem:[#allocation2 + $0x10] sm:$0xff]
    %v47 = vld [vmem:[#allocation2 + $0x18] sm:$0xff]
    %v48 = vld [vmem:[#allocation2 + $0x20] sm:$0xff]
    %v49 = vld [vmem:[#allocation2 + $0x28] sm:$0xff]
    %v50 = vld [vmem:[#allocation2 + $0x30] sm:$0xff]
    %v51 = vld [vmem:[#allocation2 + $0x38] sm:$0xff]
    %v52 = vld [vmem:[#allocation5] sm:$0xf]
    %v53 = vld [vmem:[#allocation5 + $0x4] sm:$0xf]
    %v54 = vld [vmem:[#allocation5 + $0x8] sm:$0xf]
    %v55 = vld [vmem:[#allocation5 + $0xc] sm:$0xf]
    %v56 = vld [vmem:[#allocation5 + $0x10] sm:$0xf]
    %v57 = vld [vmem:[#allocation5 + $0x14] sm:$0xf]
    %v58 = vld [vmem:[#allocation5 + $0x18] sm:$0xf]
    %v59 = vld [vmem:[#allocation5 + $0x1c] sm:$0xf]
    %v60 = vld [vmem:[#allocation5 + $0x20] sm:$0xf]
    %v61 = vld [vmem:[#allocation5 + $0x24] sm:$0xf]
    %v62 = vld [vmem:[#allocation5 + $0x28] sm:$0xf]
    %v63 = vld [vmem:[#allocation5 + $0x2c] sm:$0xf]
    %v64 = vld [vmem:[#allocation5 + $0x30] sm:$0xf]
    %v65 = vld [vmem:[#allocation5 + $0x34] sm:$0xf]
    %v66 = vld [vmem:[#allocation5 + $0x38] sm:$0xf]
    %v67 = vld [vmem:[#allocation5 + $0x3c] sm:$0xf]
    %v68 = vld [vmem:[#allocation5 + $0x40] sm:$0xf]
    %v69 = vld [vmem:[#allocation5 + $0x44] sm:$0xf]
    %v70 = vld [vmem:[#allocation5 + $0x48] sm:$0xf]
    %v71 = vld [vmem:[#allocation5 + $0x4c] sm:$0xf]
    %v72 = vld [vmem:[#allocation5 + $0x50] sm:$0xf]
    %v73 = vld [vmem:[#allocation5 + $0x54] sm:$0xf]
    %v74 = vld [vmem:[#allocation5 + $0x58] sm:$0xf]
    %v75 = vld [vmem:[#allocation5 + $0x5c] sm:$0xf]
    %v76 = vld [vmem:[#allocation5 + $0x60] sm:$0xf]
    %v77 = vld [vmem:[#allocation5 + $0x64] sm:$0xf]
    %v78 = vld [vmem:[#allocation5 + $0x68] sm:$0xf]
    %v79 = vld [vmem:[#allocation5 + $0x6c] sm:$0xf]
    %v80 = vld [vmem:[#allocation5 + $0x70] sm:$0xf]
    %v81 = vld [vmem:[#allocation5 + $0x74] sm:$0xf]
    %v82 = vld [vmem:[#allocation5 + $0x78] sm:$0xf]
    %v83 = vld [vmem:[#allocation5 + $0x7c] sm:$0xf]
    %v84 = vld [vmem:[#allocation5 + $0x80] sm:$0xf]
    %v85 = vld [vmem:[#allocation5 + $0x84] sm:$0xf]
    %v86 = vld [vmem:[#allocation5 + $0x88] sm:$0xf]
    %v87 = vld [vmem:[#allocation5 + $0x8c] sm:$0xf]
    %v88 = vld [vmem:[#allocation5 + $0x90] sm:$0xf]
    %v89 = vld [vmem:[#allocation5 + $0x94] sm:$0xf]
    %v90 = vld [vmem:[#allocation5 + $0x98] sm:$0xf]
    %v91 = vld [vmem:[#allocation5 + $0x9c] sm:$0xf]
    %v92 = vld [vmem:[#allocation5 + $0xa0] sm:$0xf]
    %v93 = vld [vmem:[#allocation5 + $0xa4] sm:$0xf]
    %v94 = vld [vmem:[#allocation5 + $0xa8] sm:$0xf]
    %v95 = vld [vmem:[#allocation5 + $0xac] sm:$0xf]
    %v96 = vld [vmem:[#allocation5 + $0xb0] sm:$0xf]
    %v97 = vld [vmem:[#allocation5 + $0xb4] sm:$0xf]
    %v98 = vld [vmem:[#allocation5 + $0xb8] sm:$0xf]
    %v99 = vld [vmem:[#allocation5 + $0xbc] sm:$0xf]
    %v100 = vld [vmem:[#allocation5 + $0xc0] sm:$0xf]
    %v101 = vld [vmem:[#allocation5 + $0xc4] sm:$0xf]
    %v102 = vld [vmem:[#allocation5 + $0xc8] sm:$0xf]
    %v103 = vld [vmem:[#allocation5 + $0xcc] sm:$0xf]
    %v104 = vld [vmem:[#allocation5 + $0xd0] sm:$0xf]
    %v105 = vld [vmem:[#allocation5 + $0xd4] sm:$0xf]
    %v106 = vld [vmem:[#allocation5 + $0xd8] sm:$0xf]
    %v107 = vld [vmem:[#allocation5 + $0xdc] sm:$0xf]
    %v108 = vld [vmem:[#allocation5 + $0xe0] sm:$0xf]
    %v109 = vld [vmem:[#allocation5 + $0xe4] sm:$0xf]
    %v110 = vld [vmem:[#allocation5 + $0xe8] sm:$0xf]
    %v111 = vld [vmem:[#allocation5 + $0xec] sm:$0xf]
    %v112 = vld [vmem:[#allocation5 + $0xf0] sm:$0xf]
    %v113 = vld [vmem:[#allocation5 + $0xf4] sm:$0xf]
    %v114 = vld [vmem:[#allocation5 + $0xf8] sm:$0xf]
    %v115 = vld [vmem:[#allocation5 + $0xfc] sm:$0xf]
    %v116 = vld [vmem:[#allocation5 + $0x100] sm:$0xf]
    %v117 = vld [vmem:[#allocation5 + $0x104] sm:$0xf]
    %v118 = vld [vmem:[#allocation5 + $0x108] sm:$0xf]
    %v119 = vld [vmem:[#allocation5 + $0x10c] sm:$0xf]
    %v120 = vld [vmem:[#allocation5 + $0x110] sm:$0xf]
    %v121 = vld [vmem:[#allocation5 + $0x114] sm:$0xf]
    %v122 = vld [vmem:[#allocation5 + $0x118] sm:$0xf]
    %v123 = vld [vmem:[#allocation5 + $0x11c] sm:$0xf]
    %v124 = vld [vmem:[#allocation5 + $0x120] sm:$0xf]
    %v125 = vld [vmem:[#allocation5 + $0x124] sm:$0xf]
    %v126 = vld [vmem:[#allocation5 + $0x128] sm:$0xf]
    %v127 = vld [vmem:[#allocation5 + $0x12c] sm:$0xf]
    %v128 = vld [vmem:[#allocation5 + $0x130] sm:$0xf]
    %v129 = vld [vmem:[#allocation5 + $0x134] sm:$0xf]
    %v130 = vld [vmem:[#allocation5 + $0x138] sm:$0xf]
    %v131 = vld [vmem:[#allocation5 + $0x13c] sm:$0xf]
    %v132 = vld [vmem:[#allocation5 + $0x140] sm:$0xf]
    %v133 = vld [vmem:[#allocation5 + $0x144] sm:$0xf]
    %v134 = vld [vmem:[#allocation5 + $0x148] sm:$0xf]
    %v135 = vld [vmem:[#allocation5 + $0x14c] sm:$0xf]
    %v136 = vld [vmem:[#allocation5 + $0x150] sm:$0xf]
    %v137 = vld [vmem:[#allocation5 + $0x154] sm:$0xf]
    %v138 = vld [vmem:[#allocation5 + $0x158] sm:$0xf]
    %v139 = vld [vmem:[#allocation5 + $0x15c] sm:$0xf]
    %v140 = vld [vmem:[#allocation5 + $0x160] sm:$0xf]
    %v141 = vld [vmem:[#allocation5 + $0x164] sm:$0xf]
    %v142 = vld [vmem:[#allocation5 + $0x168] sm:$0xf]
    %v143 = vld [vmem:[#allocation5 + $0x16c] sm:$0xf]
    %v144 = vld [vmem:[#allocation5 + $0x170] sm:$0xf]
    %v145 = vld [vmem:[#allocation5 + $0x174] sm:$0xf]
    %v146 = vld [vmem:[#allocation5 + $0x178] sm:$0xf]
    %v147 = vld [vmem:[#allocation5 + $0x17c] sm:$0xf]
    %v148 = vld [vmem:[#allocation5 + $0x180] sm:$0xf]
    %v149 = vld [vmem:[#allocation5 + $0x184] sm:$0xf]
    %v150 = vld [vmem:[#allocation5 + $0x188] sm:$0xf]
    %v151 = vld [vmem:[#allocation5 + $0x18c] sm:$0xf]
    %v152 = vld [vmem:[#allocation5 + $0x190] sm:$0xf]
    %v153 = vld [vmem:[#allocation5 + $0x194] sm:$0xf]
    %v154 = vld [vmem:[#allocation5 + $0x198] sm:$0xf]
    %v155 = vld [vmem:[#allocation5 + $0x19c] sm:$0xf]
    %v156 = vld [vmem:[#allocation5 + $0x1a0] sm:$0xf]
    %v157 = vld [vmem:[#allocation5 + $0x1a4] sm:$0xf]
    %v158 = vld [vmem:[#allocation5 + $0x1a8] sm:$0xf]
    %v159 = vld [vmem:[#allocation5 + $0x1ac] sm:$0xf]
    %v160 = vld [vmem:[#allocation5 + $0x1b0] sm:$0xf]
    %v161 = vld [vmem:[#allocation5 + $0x1b4] sm:$0xf]
    %v162 = vld [vmem:[#allocation5 + $0x1b8] sm:$0xf]
    %v163 = vld [vmem:[#allocation5 + $0x1bc] sm:$0xf]
    %v164 = vld [vmem:[#allocation5 + $0x1c0] sm:$0xf]
    %v165 = vld [vmem:[#allocation5 + $0x1c4] sm:$0xf]
    %v166 = vld [vmem:[#allocation5 + $0x1c8] sm:$0xf]
    %v167 = vld [vmem:[#allocation5 + $0x1cc] sm:$0xf]
    %v168 = vld [vmem:[#allocation5 + $0x1d0] sm:$0xf]
    %v169 = vld [vmem:[#allocation5 + $0x1d4] sm:$0xf]
    %v170 = vld [vmem:[#allocation5 + $0x1d8] sm:$0xf]
    %v171 = vld [vmem:[#allocation5 + $0x1dc] sm:$0xf]
    %v172 = vld [vmem:[#allocation5 + $0x1e0] sm:$0xf]
    %v173 = vld [vmem:[#allocation5 + $0x1e4] sm:$0xf]
    %v174 = vld [vmem:[#allocation5 + $0x1e8] sm:$0xf]
    %v175 = vld [vmem:[#allocation5 + $0x1ec] sm:$0xf]
    %v176 = vld [vmem:[#allocation5 + $0x1f0] sm:$0xf]
    %v177 = vld [vmem:[#allocation5 + $0x1f4] sm:$0xf]
    %v178 = vld [vmem:[#allocation5 + $0x1f8] sm:$0xf]
    %v179 = vld [vmem:[#allocation5 + $0x1fc] sm:$0xf]
    %v188 = vunpack.c.l.b16 %v44
    %v189 = vunpack.c.h.b16 %v44
    %v190 = vunpack.c.l.b16 %v45
    %v191 = vunpack.c.h.b16 %v45
    %v192 = vunpack.c.l.b16 %v46
    %v193 = vunpack.c.h.b16 %v46
    %v194 = vunpack.c.l.b16 %v47
    %v195 = vunpack.c.h.b16 %v47
    %v196 = vunpack.c.l.b16 %v48
    %v197 = vunpack.c.h.b16 %v48
    %v198 = vunpack.c.l.b16 %v49
    %v199 = vunpack.c.h.b16 %v49
    %v200 = vunpack.c.l.b16 %v50
    %v201 = vunpack.c.h.b16 %v50
    %v202 = vunpack.c.l.b16 %v51
    %v203 = vunpack.c.h.b16 %v51
    %v204 = vpack.c.b16 %v196, %v188
    %v205 = vpack.c.b16 %v197, %v189
    %v206 = vpack.c.b16 %v198, %v190
    %v207 = vpack.c.b16 %v199, %v191
    %v208 = vpack.c.b16 %v200, %v192
    %v209 = vpack.c.b16 %v201, %v193
    %v210 = vpack.c.b16 %v202, %v194
    %v211 = vpack.c.b16 %v203, %v195
    %v348 = vunpack.c.l.b16 %v52
    %v349 = vunpack.c.l.b16 %v53
    %v350 = vunpack.c.l.b16 %v54
    %v351 = vunpack.c.l.b16 %v55
    %v352 = vunpack.c.l.b16 %v56
    %v353 = vunpack.c.l.b16 %v57
    %v354 = vunpack.c.l.b16 %v58
    %v355 = vunpack.c.l.b16 %v59
    %v356 = vunpack.c.l.b16 %v60
    %v357 = vunpack.c.l.b16 %v61
    %v358 = vunpack.c.l.b16 %v62
    %v359 = vunpack.c.l.b16 %v63
    %v360 = vunpack.c.l.b16 %v64
    %v361 = vunpack.c.l.b16 %v65
    %v362 = vunpack.c.l.b16 %v66
    %v363 = vunpack.c.l.b16 %v67
    %v364 = vunpack.c.l.b16 %v68
    %v365 = vunpack.c.l.b16 %v69
    %v366 = vunpack.c.l.b16 %v70
    %v367 = vunpack.c.l.b16 %v71
    %v368 = vunpack.c.l.b16 %v72
    %v369 = vunpack.c.l.b16 %v73
    %v370 = vunpack.c.l.b16 %v74
    %v371 = vunpack.c.l.b16 %v75
    %v372 = vunpack.c.l.b16 %v76
    %v373 = vunpack.c.l.b16 %v77
    %v374 = vunpack.c.l.b16 %v78
    %v375 = vunpack.c.l.b16 %v79
    %v376 = vunpack.c.l.b16 %v80
    %v377 = vunpack.c.l.b16 %v81
    %v378 = vunpack.c.l.b16 %v82
    %v379 = vunpack.c.l.b16 %v83
    %v380 = vunpack.c.l.b16 %v84
    %v381 = vunpack.c.l.b16 %v85
    %v382 = vunpack.c.l.b16 %v86
    %v383 = vunpack.c.l.b16 %v87
    %v384 = vunpack.c.l.b16 %v88
    %v385 = vunpack.c.l.b16 %v89
    %v386 = vunpack.c.l.b16 %v90
    %v387 = vunpack.c.l.b16 %v91
    %v388 = vunpack.c.l.b16 %v92
    %v389 = vunpack.c.l.b16 %v93
    %v390 = vunpack.c.l.b16 %v94
    %v391 = vunpack.c.l.b16 %v95
    %v392 = vunpack.c.l.b16 %v96
    %v393 = vunpack.c.l.b16 %v97
    %v394 = vunpack.c.l.b16 %v98
    %v395 = vunpack.c.l.b16 %v99
    %v396 = vunpack.c.l.b16 %v100
    %v397 = vunpack.c.l.b16 %v101
    %v398 = vunpack.c.l.b16 %v102
    %v399 = vunpack.c.l.b16 %v103
    %v400 = vunpack.c.l.b16 %v104
    %v401 = vunpack.c.l.b16 %v105
    %v402 = vunpack.c.l.b16 %v106
    %v403 = vunpack.c.l.b16 %v107
    %v404 = vunpack.c.l.b16 %v108
    %v405 = vunpack.c.l.b16 %v109
    %v406 = vunpack.c.l.b16 %v110
    %v407 = vunpack.c.l.b16 %v111
    %v408 = vunpack.c.l.b16 %v112
    %v409 = vunpack.c.l.b16 %v113
    %v410 = vunpack.c.l.b16 %v114
    %v411 = vunpack.c.l.b16 %v115
    %v412 = vunpack.c.l.b16 %v116
    %v413 = vunpack.c.l.b16 %v117
    %v414 = vunpack.c.l.b16 %v118
    %v415 = vunpack.c.l.b16 %v119
    %v416 = vunpack.c.l.b16 %v120
    %v417 = vunpack.c.l.b16 %v121
    %v418 = vunpack.c.l.b16 %v122
    %v419 = vunpack.c.l.b16 %v123
    %v420 = vunpack.c.l.b16 %v124
    %v421 = vunpack.c.l.b16 %v125
    %v422 = vunpack.c.l.b16 %v126
    %v423 = vunpack.c.l.b16 %v127
    %v424 = vunpack.c.l.b16 %v128
    %v425 = vunpack.c.l.b16 %v129
    %v426 = vunpack.c.l.b16 %v130
    %v427 = vunpack.c.l.b16 %v131
    %v428 = vunpack.c.l.b16 %v132
    %v429 = vunpack.c.l.b16 %v133
    %v430 = vunpack.c.l.b16 %v134
    %v431 = vunpack.c.l.b16 %v135
    %v432 = vunpack.c.l.b16 %v136
    %v433 = vunpack.c.l.b16 %v137
    %v434 = vunpack.c.l.b16 %v138
    %v435 = vunpack.c.l.b16 %v139
    %v436 = vunpack.c.l.b16 %v140
    %v437 = vunpack.c.l.b16 %v141
    %v438 = vunpack.c.l.b16 %v142
    %v439 = vunpack.c.l.b16 %v143
    %v440 = vunpack.c.l.b16 %v144
    %v441 = vunpack.c.l.b16 %v145
    %v442 = vunpack.c.l.b16 %v146
    %v443 = vunpack.c.l.b16 %v147
    %v444 = vunpack.c.l.b16 %v148
    %v445 = vunpack.c.l.b16 %v149
    %v446 = vunpack.c.l.b16 %v150
    %v447 = vunpack.c.l.b16 %v151
    %v448 = vunpack.c.l.b16 %v152
    %v449 = vunpack.c.l.b16 %v153
    %v450 = vunpack.c.l.b16 %v154
    %v451 = vunpack.c.l.b16 %v155
    %v452 = vunpack.c.l.b16 %v156
    %v453 = vunpack.c.l.b16 %v157
    %v454 = vunpack.c.l.b16 %v158
    %v455 = vunpack.c.l.b16 %v159
    %v456 = vunpack.c.l.b16 %v160
    %v457 = vunpack.c.l.b16 %v161
    %v458 = vunpack.c.l.b16 %v162
    %v459 = vunpack.c.l.b16 %v163
    %v460 = vunpack.c.l.b16 %v164
    %v461 = vunpack.c.l.b16 %v165
    %v462 = vunpack.c.l.b16 %v166
    %v463 = vunpack.c.l.b16 %v167
    %v464 = vunpack.c.l.b16 %v168
    %v465 = vunpack.c.l.b16 %v169
    %v466 = vunpack.c.l.b16 %v170
    %v467 = vunpack.c.l.b16 %v171
    %v468 = vunpack.c.l.b16 %v172
    %v469 = vunpack.c.l.b16 %v173
    %v470 = vunpack.c.l.b16 %v174
    %v471 = vunpack.c.l.b16 %v175
    %v472 = vunpack.c.l.b16 %v176
    %v473 = vunpack.c.l.b16 %v177
    %v474 = vunpack.c.l.b16 %v178
    %v475 = vunpack.c.l.b16 %v179
    %v476 = vpack.c.b16 %v349, %v348
    %v477 = vpack.c.b16 %v351, %v350
    %v478 = vpack.c.b16 %v353, %v352
    %v479 = vpack.c.b16 %v355, %v354
    %v480 = vpack.c.b16 %v357, %v356
    %v481 = vpack.c.b16 %v359, %v358
    %v482 = vpack.c.b16 %v361, %v360
    %v483 = vpack.c.b16 %v363, %v362
    %v484 = vpack.c.b16 %v365, %v364
    %v485 = vpack.c.b16 %v367, %v366
    %v486 = vpack.c.b16 %v369, %v368
    %v487 = vpack.c.b16 %v371, %v370
    %v488 = vpack.c.b16 %v373, %v372
    %v489 = vpack.c.b16 %v375, %v374
    %v490 = vpack.c.b16 %v377, %v376
    %v491 = vpack.c.b16 %v379, %v378
    %v492 = vpack.c.b16 %v381, %v380
    %v493 = vpack.c.b16 %v383, %v382
    %v494 = vpack.c.b16 %v385, %v384
    %v495 = vpack.c.b16 %v387, %v386
    %v496 = vpack.c.b16 %v389, %v388
    %v497 = vpack.c.b16 %v391, %v390
    %v498 = vpack.c.b16 %v393, %v392
    %v499 = vpack.c.b16 %v395, %v394
    %v500 = vpack.c.b16 %v397, %v396
    %v501 = vpack.c.b16 %v399, %v398
    %v502 = vpack.c.b16 %v401, %v400
    %v503 = vpack.c.b16 %v403, %v402
    %v504 = vpack.c.b16 %v405, %v404
    %v505 = vpack.c.b16 %v407, %v406
    %v506 = vpack.c.b16 %v409, %v408
    %v507 = vpack.c.b16 %v411, %v410
    %v508 = vpack.c.b16 %v413, %v412
    %v509 = vpack.c.b16 %v415, %v414
    %v510 = vpack.c.b16 %v417, %v416
    %v511 = vpack.c.b16 %v419, %v418
    %v512 = vpack.c.b16 %v421, %v420
    %v513 = vpack.c.b16 %v423, %v422
    %v514 = vpack.c.b16 %v425, %v424
    %v515 = vpack.c.b16 %v427, %v426
    %v516 = vpack.c.b16 %v429, %v428
    %v517 = vpack.c.b16 %v431, %v430
    %v518 = vpack.c.b16 %v433, %v432
    %v519 = vpack.c.b16 %v435, %v434
    %v520 = vpack.c.b16 %v437, %v436
    %v521 = vpack.c.b16 %v439, %v438
    %v522 = vpack.c.b16 %v441, %v440
    %v523 = vpack.c.b16 %v443, %v442
    %v524 = vpack.c.b16 %v445, %v444
    %v525 = vpack.c.b16 %v447, %v446
    %v526 = vpack.c.b16 %v449, %v448
    %v527 = vpack.c.b16 %v451, %v450
    %v528 = vpack.c.b16 %v453, %v452
    %v529 = vpack.c.b16 %v455, %v454
    %v530 = vpack.c.b16 %v457, %v456
    %v531 = vpack.c.b16 %v459, %v458
    %v532 = vpack.c.b16 %v461, %v460
    %v533 = vpack.c.b16 %v463, %v462
    %v534 = vpack.c.b16 %v465, %v464
    %v535 = vpack.c.b16 %v467, %v466
    %v536 = vpack.c.b16 %v469, %v468
    %v537 = vpack.c.b16 %v471, %v470
    %v538 = vpack.c.b16 %v473, %v472
    %v539 = vpack.c.b16 %v475, %v474
    %604 = vmatprep.subr.bf16.mxu0 0
    %605 = vmatpush1.bf16.msra.mxu0 %v476
    %606 = vmatprep.subr.bf16.mxu0 0
    %607 = vmatpush1.bf16.msra.mxu0 %v477
    %608 = vmatprep.subr.bf16.mxu0 0
    %609 = vmatpush1.bf16.msra.mxu0 %v478
    %610 = vmatprep.subr.bf16.mxu0 0
    %611 = vmatpush1.bf16.msra.mxu0 %v479
    %612 = vmatprep.subr.bf16.mxu0 0
    %613 = vmatpush1.bf16.msra.mxu0 %v480
    %614 = vmatprep.subr.bf16.mxu0 0
    %615 = vmatpush1.bf16.msra.mxu0 %v481
    %616 = vmatprep.subr.bf16.mxu0 0
    %617 = vmatpush1.bf16.msra.mxu0 %v482
    %618 = vmatprep.subr.bf16.mxu0 0
    %619 = vmatpush1.bf16.msra.mxu0 %v483
    %620 = vmatprep.subr.bf16.mxu0 0
    %621 = vmatpush1.bf16.msra.mxu0 %v484
    %622 = vmatprep.subr.bf16.mxu0 0
    %623 = vmatpush1.bf16.msra.mxu0 %v485
    %624 = vmatprep.subr.bf16.mxu0 0
    %625 = vmatpush1.bf16.msra.mxu0 %v486
    %626 = vmatprep.subr.bf16.mxu0 0
    %627 = vmatpush1.bf16.msra.mxu0 %v487
    %628 = vmatprep.subr.bf16.mxu0 0
    %629 = vmatpush1.bf16.msra.mxu0 %v488
    %630 = vmatprep.subr.bf16.mxu0 0
    %631 = vmatpush1.bf16.msra.mxu0 %v489
    %632 = vmatprep.subr.bf16.mxu0 0
    %633 = vmatpush1.bf16.msra.mxu0 %v490
    %634 = vmatprep.subr.bf16.mxu0 0
    %635 = vmatpush1.bf16.msra.mxu0 %v491
    %636 = vmatprep.mubr.bf16.mxu0 %v205
    %637 = vmatmul.mubr.bf16.gmra.mrb[0].mxu0 %v204
    %v638 = vpop.f32.mrb[0].mxu0
    %v639 = vadd.f32 0.0, %v638
    %v640 = vpop.f32.mrb[0].mxu0
    %v641 = vpop.f32.mrb[0].mxu0
    %v642 = vadd.f32 0.0, %v641
    %v643 = vpop.f32.mrb[0].mxu0
    %644 = vdwg.mxu0
    %645 = vmatprep.subr.bf16.mxu0 0
    %646 = vmatpush1.bf16.msra.mxu0 %v492
    %647 = vmatprep.subr.bf16.mxu0 0
    %648 = vmatpush1.bf16.msra.mxu0 %v493
    %649 = vmatprep.subr.bf16.mxu0 0
    %650 = vmatpush1.bf16.msra.mxu0 %v494
    %651 = vmatprep.subr.bf16.mxu0 0
    %652 = vmatpush1.bf16.msra.mxu0 %v495
    %653 = vmatprep.subr.bf16.mxu0 0
    %654 = vmatpush1.bf16.msra.mxu0 %v496
    %655 = vmatprep.subr.bf16.mxu0 0
    %656 = vmatpush1.bf16.msra.mxu0 %v497
    %657 = vmatprep.subr.bf16.mxu0 0
    %658 = vmatpush1.bf16.msra.mxu0 %v498
    %659 = vmatprep.subr.bf16.mxu0 0
    %660 = vmatpush1.bf16.msra.mxu0 %v499
    %661 = vmatprep.subr.bf16.mxu0 0
    %662 = vmatpush1.bf16.msra.mxu0 %v500
    %663 = vmatprep.subr.bf16.mxu0 0
    %664 = vmatpush1.bf16.msra.mxu0 %v501
    %665 = vmatprep.subr.bf16.mxu0 0
    %666 = vmatpush1.bf16.msra.mxu0 %v502
    %667 = vmatprep.subr.bf16.mxu0 0
    %668 = vmatpush1.bf16.msra.mxu0 %v503
    %669 = vmatprep.subr.bf16.mxu0 0
    %670 = vmatpush1.bf16.msra.mxu0 %v504
    %671 = vmatprep.subr.bf16.mxu0 0
    %672 = vmatpush1.bf16.msra.mxu0 %v505
    %673 = vmatprep.subr.bf16.mxu0 0
    %674 = vmatpush1.bf16.msra.mxu0 %v506
    %675 = vmatprep.subr.bf16.mxu0 0
    %676 = vmatpush1.bf16.msra.mxu0 %v507
    %677 = vmatprep.mubr.bf16.mxu0 %v207
    %678 = vmatmul.mubr.bf16.gmra.mrb[0].mxu0 %v206
    %v679 = vpop.f32.mrb[0].mxu0
    %v680 = vadd.f32 %v639, %v679
    %v681 = vpop.f32.mrb[0].mxu0
    %v682 = vpop.f32.mrb[0].mxu0
    %v683 = vadd.f32 %v642, %v682
    %v684 = vpop.f32.mrb[0].mxu0
    %685 = vdwg.mxu0
    %686 = vmatprep.subr.bf16.mxu0 0
    %687 = vmatpush1.bf16.msra.mxu0 %v508
    %688 = vmatprep.subr.bf16.mxu0 0
    %689 = vmatpush1.bf16.msra.mxu0 %v509
    %690 = vmatprep.subr.bf16.mxu0 0
    %691 = vmatpush1.bf16.msra.mxu0 %v510
    %692 = vmatprep.subr.bf16.mxu0 0
    %693 = vmatpush1.bf16.msra.mxu0 %v511
    %694 = vmatprep.subr.bf16.mxu0 0
    %695 = vmatpush1.bf16.msra.mxu0 %v512
    %696 = vmatprep.subr.bf16.mxu0 0
    %697 = vmatpush1.bf16.msra.mxu0 %v513
    %698 = vmatprep.subr.bf16.mxu0 0
    %699 = vmatpush1.bf16.msra.mxu0 %v514
    %700 = vmatprep.subr.bf16.mxu0 0
    %701 = vmatpush1.bf16.msra.mxu0 %v515
    %702 = vmatprep.subr.bf16.mxu0 0
    %703 = vmatpush1.bf16.msra.mxu0 %v516
    %704 = vmatprep.subr.bf16.mxu0 0
    %705 = vmatpush1.bf16.msra.mxu0 %v517
    %706 = vmatprep.subr.bf16.mxu0 0
    %707 = vmatpush1.bf16.msra.mxu0 %v518
    %708 = vmatprep.subr.bf16.mxu0 0
    %709 = vmatpush1.bf16.msra.mxu0 %v519
    %710 = vmatprep.subr.bf16.mxu0 0
    %711 = vmatpush1.bf16.msra.mxu0 %v520
    %712 = vmatprep.subr.bf16.mxu0 0
    %713 = vmatpush1.bf16.msra.mxu0 %v521
    %714 = vmatprep.subr.bf16.mxu0 0
    %715 = vmatpush1.bf16.msra.mxu0 %v522
    %716 = vmatprep.subr.bf16.mxu0 0
    %717 = vmatpush1.bf16.msra.mxu0 %v523
    %718 = vmatprep.mubr.bf16.mxu0 %v209
    %719 = vmatmul.mubr.bf16.gmra.mrb[0].mxu0 %v208
    %v720 = vpop.f32.mrb[0].mxu0
    %v721 = vadd.f32 %v680, %v720
    %v722 = vpop.f32.mrb[0].mxu0
    %v723 = vpop.f32.mrb[0].mxu0
    %v724 = vadd.f32 %v683, %v723
    %v725 = vpop.f32.mrb[0].mxu0
    %726 = vdwg.mxu0
    %727 = vmatprep.subr.bf16.mxu0 0
    %728 = vmatpush1.bf16.msra.mxu0 %v524
    %729 = vmatprep.subr.bf16.mxu0 0
    %730 = vmatpush1.bf16.msra.mxu0 %v525
    %731 = vmatprep.subr.bf16.mxu0 0
    %732 = vmatpush1.bf16.msra.mxu0 %v526
    %733 = vmatprep.subr.bf16.mxu0 0
    %734 = vmatpush1.bf16.msra.mxu0 %v527
    %735 = vmatprep.subr.bf16.mxu0 0
    %736 = vmatpush1.bf16.msra.mxu0 %v528
    %737 = vmatprep.subr.bf16.mxu0 0
    %738 = vmatpush1.bf16.msra.mxu0 %v529
    %739 = vmatprep.subr.bf16.mxu0 0
    %740 = vmatpush1.bf16.msra.mxu0 %v530
    %741 = vmatprep.subr.bf16.mxu0 0
    %742 = vmatpush1.bf16.msra.mxu0 %v531
    %743 = vmatprep.subr.bf16.mxu0 0
    %744 = vmatpush1.bf16.msra.mxu0 %v532
    %745 = vmatprep.subr.bf16.mxu0 0
    %746 = vmatpush1.bf16.msra.mxu0 %v533
    %747 = vmatprep.subr.bf16.mxu0 0
    %748 = vmatpush1.bf16.msra.mxu0 %v534
    %749 = vmatprep.subr.bf16.mxu0 0
    %750 = vmatpush1.bf16.msra.mxu0 %v535
    %751 = vmatprep.subr.bf16.mxu0 0
    %752 = vmatpush1.bf16.msra.mxu0 %v536
    %753 = vmatprep.subr.bf16.mxu0 0
    %754 = vmatpush1.bf16.msra.mxu0 %v537
    %755 = vmatprep.subr.bf16.mxu0 0
    %756 = vmatpush1.bf16.msra.mxu0 %v538
    %757 = vmatprep.subr.bf16.mxu0 0
    %758 = vmatpush1.bf16.msra.mxu0 %v539
    %759 = vmatprep.mubr.bf16.mxu0 %v211
    %760 = vmatmul.mubr.bf16.gmra.mrb[0].mxu0 %v210
    %v761 = vpop.f32.mrb[0].mxu0
    %v762 = vadd.f32 %v721, %v761
    %v763 = vpop.f32.mrb[0].mxu0
    %v764 = vpop.f32.mrb[0].mxu0
    %v765 = vadd.f32 %v724, %v764
    %v766 = vpop.f32.mrb[0].mxu0
    %767 = vdwg.mxu0
    %v768 = vld [vmem:[%s2] sm:$0x3]
    %v769 = vlaneseq
    %v770 = vshrl.u32 %v769, 7
    %v771 = vsub.s32 0, %v770
    %v772 = vrot.slane %v768, %v771
    %v773 = vmul.f32 %v762, %v772
    %v774 = vmul.f32 %v765, %v772
    %v775 = vlaneseq
    %v776 = vshrl.u32 %v775, 7
    %v777 = vsub.s32 1, %v776
    %v778 = vrot.slane %v768, %v777
    %v779 = vadd.f32 %v773, %v778
    %v780 = vadd.f32 %v774, %v778
    %v781 = vtanh.pop %v779
    %v782 = vtanh.pop %v780
    %783 = vst [vmem:[#allocation7] sm:$0xff] %v781
    %784 = vst [vmem:[#allocation7 + $0x8] sm:$0xff] %v782
    // Predicated region
    $region22: #{tpu_custom_call.1} parent=1 // pred_check
      _
    $region23: #{tpu_custom_call.1} parent=1 // pred_check_branch
      %786 = sbr.rel (0) target = $region25
    $region24: #{tpu_custom_call.1} parent=1 // pred_region
      %s788 = ssub.s32 256, 256
      %789 = vsyncadd [#allocation4], %s788
      %s790 = sshll.u32 [#allocation7], 4
      %s791 = int_to_ptr.vmem [resolvable:$true] %s790
      %796 = dma.vmem_to_hbm [thread:$0]  %s791, 256, %s3, [#allocation4], 128, 128, 8
    $region25: #{tpu_custom_call.1} parent=1 // pred_fallthru
      _
    // Predicated region
    $region26: #{tpu_custom_call.1} parent=1 // pred_check
      _
    $region27: #{tpu_custom_call.1} parent=1 // pred_check_branch
      %798 = sbr.rel (0) target = $region29
    $region28: #{tpu_custom_call.1} parent=1 // pred_region
      %799 = dma.done [#allocation4], 256
    $region29: #{tpu_custom_call.1} parent=1 // pred_fallthru
      _
    %800 = vsyncpa [#allocation3], 1
    %801 = vsyncpa [#allocation6], 1
    %802 = vsyncpa [#allocation4], 1

</llo_original>
